<compile_context>
chip_gen: v7x
topology: tpu7x:2x2x1
jax: 0.10.0
libtpu: 0.0.40
codegen_flags: <defaults>
</compile_context>

<pallas_src>
import functools
import math

import jax
import jax.numpy as jnp
from jax import lax
from jax.experimental import pallas as pl
from jax.experimental.pallas import tpu as pltpu


_LANE = 128
_SUBLANE = 8
_TARGET_STEP_BYTES = 4 * 1024 * 1024   # streamed bytes per grid step target
_VMEM_BUDGET_BYTES = 24 * 1024 * 1024  # double-buffered x+out tiles (+ weights)
_VMEM_LIMIT_BYTES = 32 * 1024 * 1024   # safe scoped-VMEM limit on v5e/v6e/v7x
_MAX_TL = 16384


def _conv1x1_kernel(w_ref, b_ref, x_ref, o_ref, *, precision):
    # w_ref: (C_out, C_in)   b_ref: (C_out, 1)
    # x_ref: (TN, C_in, TL)  o_ref: (TN, C_out, TL)   (L on the lane axis)
    w = w_ref[...]
    b = b_ref[...]
    for bi in range(x_ref.shape[0]):   # static unroll over folded batch samples
        acc = jnp.dot(w, x_ref[bi], precision=precision,
                      preferred_element_type=jnp.float32)
        o_ref[bi] = (acc + b).astype(o_ref.dtype)


def _pick_tiles(N, C_in, C_out, L, in_bytes, out_bytes, w_bytes):
    """Pick (TN, TL) so each grid step streams a few MiB and fits VMEM."""
    per_col = C_in * in_bytes + C_out * out_bytes       # bytes per lane column
    step_cap = max(_LANE * per_col,
                   (_VMEM_BUDGET_BYTES - w_bytes) // 2)  # double-buffered x+out
    target = min(_TARGET_STEP_BYTES, step_cap)

    tl = (target // per_col) // _LANE * _LANE
    tl = max(_LANE, min(tl, _MAX_TL))
    if tl >= L:
        tl = L   # full-extent block: legal for any L, no ragged tile at all
    # else: tl is a multiple of 128; the final block may be ragged and Pallas
    # masks the out-of-bounds writeback (contraction over C_in is in-bounds).

    tn = 1
    if tl == L and N > 1:
        # Whole length fits in one step: fold batch samples per step to
        # amortize per-step overhead, within the per-step VMEM cap.
        for d in range(N, 0, -1):
            if N % d == 0 and d * tl * per_col <= step_cap:
                tn = d
                break
    return tn, tl


def outconv_forward(x, weight, bias, *, compute_dtype=None):
    """Conv1d(kernel_size=1) forward.

    Args:
      x:      (N, C_in, L)      float32 (PyTorch NCL layout)
      weight: (C_out, C_in, 1)  float32 (PyTorch Conv1d weight shape)
      bias:   (C_out,)          float32
      compute_dtype: dtype for the streamed x / W operands. Defaults to x.dtype
        (float32 == exact PyTorch numerics). Pass jnp.bfloat16 to halve HBM
        traffic; accumulation and bias add remain float32.

    Returns:
      (N, C_out, L) float32
    """
    N, C_in, L = x.shape
    C_out = weight.shape[0]
    out_dtype = jnp.float32

    if compute_dtype is None:
        compute_dtype = x.dtype
    compute_dtype = jnp.dtype(compute_dtype)

    w_mat = weight[:, :, 0].astype(compute_dtype)      # (C_out, C_in), resident
    b_col = bias.reshape(C_out, 1).astype(jnp.float32)  # broadcasts over lanes
    x = x.astype(compute_dtype)

    # Pad tiny C_out up to a full 8-sublane group (whole-vreg stores); the
    # weight/bias pad rows are zero so the extra rows are discarded at the end.
    C_out_p = _SUBLANE if C_out < _SUBLANE else C_out
    if C_out_p != C_out:
        w_mat = jnp.pad(w_mat, ((0, C_out_p - C_out), (0, 0)))
        b_col = jnp.pad(b_col, ((0, C_out_p - C_out), (0, 0)))

    in_bytes = compute_dtype.itemsize
    out_bytes = jnp.dtype(out_dtype).itemsize
    w_bytes = C_out_p * C_in * in_bytes + C_out_p * 4

    TN, TL = _pick_tiles(N, C_in, C_out_p, L, in_bytes, out_bytes, w_bytes)
    num_l = pl.cdiv(L, TL)
    num_n = N // TN

    # Longer axis first so v7x megacore sharding gets balanced work.
    if num_l >= num_n:
        grid = (num_l, num_n)
        data_map = lambda l, n: (n, 0, l)
        const_map = lambda l, n: (0, 0)
    else:
        grid = (num_n, num_l)
        data_map = lambda n, l: (n, 0, l)
        const_map = lambda n, l: (0, 0)

    flops = 2 * N * L * C_in * C_out_p
    bytes_accessed = (N * C_in * L * in_bytes
                      + N * C_out_p * L * out_bytes + w_bytes)

    kernel = functools.partial(
        _conv1x1_kernel,
        precision=(lax.Precision.HIGHEST if compute_dtype == jnp.float32
                   else lax.Precision.DEFAULT))

    out = pl.pallas_call(
        kernel,
        out_shape=jax.ShapeDtypeStruct((N, C_out_p, L), out_dtype),
        grid_spec=pltpu.PrefetchScalarGridSpec(
            num_scalar_prefetch=0,
            grid=grid,
            in_specs=[
                # Weight / bias: constant index_map, single-buffered (resident).
                pl.BlockSpec((C_out_p, C_in), const_map,
                             pipeline_mode=pl.Buffered(1)),
                pl.BlockSpec((C_out_p, 1), const_map,
                             pipeline_mode=pl.Buffered(1)),
                # Activations: stream (TN, C_in, TL) slabs, double-buffered.
                pl.BlockSpec((TN, C_in, TL), data_map),
            ],
            out_specs=pl.BlockSpec((TN, C_out_p, TL), data_map),
        ),
        compiler_params=pltpu.CompilerParams(
            dimension_semantics=("parallel", "parallel"),
            vmem_limit_bytes=_VMEM_LIMIT_BYTES,
        ),
        cost_estimate=pl.CostEstimate(
            flops=flops, transcendentals=0, bytes_accessed=bytes_accessed),
    )(w_mat, b_col, x)

    if C_out_p != C_out:
        out = out[:, :C_out, :]
    return out


def init_outconv_params(key, in_ch, out_ch):
    """Matches nn.Conv1d default init: uniform(+/- 1/sqrt(fan_in)), k=1."""
    kw, kb = jax.random.split(key)
    k = 1.0 / math.sqrt(in_ch * 1)
    weight = jax.random.uniform(kw, (out_ch, in_ch, 1), jnp.float32, -k, k)
    bias = jax.random.uniform(kb, (out_ch,), jnp.float32, -k, k)
    return weight, bias


if __name__ == "__main__":
    key = jax.random.PRNGKey(0)

    def run_case(case_key, N, in_ch, out_ch, L):
        k_x, k_p = jax.random.split(case_key)
        x = jax.random.normal(k_x, (N, in_ch, L), jnp.float32)
        weight, bias = init_outconv_params(k_p, in_ch, out_ch)
        y = jax.block_until_ready(jax.jit(outconv_forward)(x, weight, bias))
        y_ref = jnp.einsum("ncl,oc->nol", x, weight[:, :, 0]) + bias[None, :, None]
        assert y.shape == (N, out_ch, L), (y.shape, (N, out_ch, L))
        assert jnp.allclose(y, y_ref, atol=1e-5, rtol=1e-5), \
            f"mismatch vs reference for shape {(N, in_ch, out_ch, L)}"

    key1, key2 = jax.random.split(key)
    # Small shape; C_out < 8 exercises the sublane-padding path.
    run_case(key1, N=2, in_ch=4, out_ch=3, L=16)
    # L not a multiple of 128: exercises the no-pad / full-extent block path.
    run_case(key2, N=2, in_ch=8, out_ch=8, L=300)

    print("KERNEL_OK")
</pallas_src>

<mosaic_0001>
module attributes {stable_mosaic.version = 11 : i64} {
  func.func @_conv1x1_kernel(%arg0: i32, %arg1: i32, %arg2: memref<8x4xf32, #tpu.memory_space<vmem>>, %arg3: memref<8x1xf32, #tpu.memory_space<vmem>>, %arg4: memref<2x4x16xf32, #tpu.memory_space<vmem>>, %arg5: memref<2x8x16xf32, #tpu.memory_space<vmem>>) attributes {dimension_semantics = [#tpu.dimension_semantics<parallel>, #tpu.dimension_semantics<parallel>], iteration_bounds = array<i64: 1, 1>, scalar_prefetch = 0 : i64, scratch_operands = 0 : i64, tpu.core_type = #tpu.core_type<tc>, window_params = [{pipeline_mode = #tpu.pipeline_mode<synchronous>, transform_indices = @transform_0, window_bounds = array<i64: 8, 4>}, {pipeline_mode = #tpu.pipeline_mode<synchronous>, transform_indices = @transform_1, window_bounds = array<i64: 8, 1>}, {transform_indices = @transform_2, window_bounds = array<i64: 2, 4, 16>}, {transform_indices = @transform_3, window_bounds = array<i64: 2, 8, 16>}]} {
    %c0 = arith.constant 0 : index
    %c0_0 = arith.constant 0 : index
    %0 = vector.load %arg2[%c0, %c0_0] : memref<8x4xf32, #tpu.memory_space<vmem>>, vector<8x4xf32>
    %c0_1 = arith.constant 0 : index
    %c0_2 = arith.constant 0 : index
    %1 = vector.load %arg3[%c0_1, %c0_2] : memref<8x1xf32, #tpu.memory_space<vmem>>, vector<8x1xf32>
    %c0_3 = arith.constant 0 : index
    %c0_4 = arith.constant 0 : index
    %c0_5 = arith.constant 0 : index
    %2 = vector.load %arg4[%c0_3, %c0_4, %c0_5] : memref<2x4x16xf32, #tpu.memory_space<vmem>>, vector<1x4x16xf32>
    %3 = vector.shape_cast %2 : vector<1x4x16xf32> to vector<4x16xf32>
    %cst = arith.constant dense<0.000000e+00> : vector<8x16xf32>
    %4 = tpu.matmul %0, %3, %cst {dimension_numbers = #tpu.dot_dimension_numbers<[1], [0], [0], [1], [0, 0, 1, 1], [], []>, precision = #tpu.contract_precision<fp32>} : vector<8x4xf32>, vector<4x16xf32>, vector<8x16xf32> -> vector<8x16xf32>
    %5 = vector.broadcast %1 : vector<8x1xf32> to vector<8x16xf32>
    %6 = arith.addf %4, %5 : vector<8x16xf32>
    %c0_6 = arith.constant 0 : index
    %c0_7 = arith.constant 0 : index
    %c0_8 = arith.constant 0 : index
    %7 = vector.load %arg5[%c0_6, %c0_7, %c0_8] : memref<2x8x16xf32, #tpu.memory_space<vmem>>, vector<1x8x16xf32>
    %8 = vector.shape_cast %7 : vector<1x8x16xf32> to vector<8x16xf32>
    %9 = vector.shape_cast %6 : vector<8x16xf32> to vector<1x8x16xf32>
    tpu.vector_store %arg5[%c0_6, %c0_7, %c0_8], %9 {strides = array<i32>} : memref<2x8x16xf32, #tpu.memory_space<vmem>>, vector<1x8x16xf32>,
    %c1 = arith.constant 1 : index
    %c0_9 = arith.constant 0 : index
    %c0_10 = arith.constant 0 : index
    %10 = vector.load %arg4[%c1, %c0_9, %c0_10] : memref<2x4x16xf32, #tpu.memory_space<vmem>>, vector<1x4x16xf32>
    %11 = vector.shape_cast %10 : vector<1x4x16xf32> to vector<4x16xf32>
    %cst_11 = arith.constant dense<0.000000e+00> : vector<8x16xf32>
    %12 = tpu.matmul %0, %11, %cst_11 {dimension_numbers = #tpu.dot_dimension_numbers<[1], [0], [0], [1], [0, 0, 1, 1], [], []>, precision = #tpu.contract_precision<fp32>} : vector<8x4xf32>, vector<4x16xf32>, vector<8x16xf32> -> vector<8x16xf32>
    %13 = vector.broadcast %1 : vector<8x1xf32> to vector<8x16xf32>
    %14 = arith.addf %12, %13 : vector<8x16xf32>
    %c1_12 = arith.constant 1 : index
    %c0_13 = arith.constant 0 : index
    %c0_14 = arith.constant 0 : index
    %15 = vector.load %arg5[%c1_12, %c0_13, %c0_14] : memref<2x8x16xf32, #tpu.memory_space<vmem>>, vector<1x8x16xf32>
    %16 = vector.shape_cast %15 : vector<1x8x16xf32> to vector<8x16xf32>
    %17 = vector.shape_cast %14 : vector<8x16xf32> to vector<1x8x16xf32>
    tpu.vector_store %arg5[%c1_12, %c0_13, %c0_14], %17 {strides = array<i32>} : memref<2x8x16xf32, #tpu.memory_space<vmem>>, vector<1x8x16xf32>,
    return
  }
  func.func @transform_0(%arg0: i32, %arg1: i32) -> (i32, i32) {
    %c0_i32 = arith.constant 0 : i32
    %c0_i32_0 = arith.constant 0 : i32
    %c0_i32_1 = arith.constant 0 : i32
    return %c0_i32, %c0_i32_0 : i32, i32
  }
  func.func @transform_1(%arg0: i32, %arg1: i32) -> (i32, i32) {
    %c0_i32 = arith.constant 0 : i32
    %c0_i32_0 = arith.constant 0 : i32
    %c0_i32_1 = arith.constant 0 : i32
    return %c0_i32, %c0_i32_0 : i32, i32
  }
  func.func @transform_2(%arg0: i32, %arg1: i32) -> (i32, i32, i32) {
    %c0_i32 = arith.constant 0 : i32
    %c0_i32_0 = arith.constant 0 : i32
    return %arg1, %c0_i32, %arg0 : i32, i32, i32
  }
  func.func @transform_3(%arg0: i32, %arg1: i32) -> (i32, i32, i32) {
    %c0_i32 = arith.constant 0 : i32
    %c0_i32_0 = arith.constant 0 : i32
    return %arg1, %c0_i32, %arg0 : i32, i32, i32
  }
}

</mosaic_0001>

<llo_original>
// kernel: outconv_forward.1
$region0: #{outconv_forward.1}
  #allocation0 [shape = 'u32[]', space=smem, size = 0x4, offset = 0x4, fixed_abs, tag = 'smem constant byte address 0x4 - core index']
  #allocation1 [shape = 'u32[144,128]{1,0:T(1,128)}', space=vmem, size = 0x12000, scoped, tag = 'internal scratch']
  %s0 = inlined_call_operand.vmem [shape: f32[8,4], index: 0, kind: input, shape index: {}]
  %s1 = inlined_call_operand.vmem [shape: f32[8,1], index: 1, kind: input, shape index: {}]
  %s2 = inlined_call_operand.vmem [shape: f32[2,4,16], index: 2, kind: input, shape index: {}]
  %s3 = inlined_call_operand.vmem [shape: f32[2,8,16], index: 3, kind: output, shape index: {}]
  %s4 = sld [smem:[#allocation0]]
  $region22: #{outconv_forward.1} parent=0
    _
  %s6 = ssub.s32 1, %s4
  %s7 = scalar_select 0, %s6, %s4
  // Predicated region
  $region2: #{outconv_forward.1} parent=0 // pred_check
    _
  $region3: #{outconv_forward.1} parent=0 // pred_check_branch
    %9 = sbr.rel (0) target = $region5
  $region4: #{outconv_forward.1} parent=0 // pred_region
    _
  $region5: #{outconv_forward.1} parent=0 // pred_fallthru
    _
  // Predicated region
  $region6: #{outconv_forward.1} parent=0 // pred_check
    _
  $region7: #{outconv_forward.1} parent=0 // pred_check_branch
    %11 = sbr.rel (0) target = $region9
  $region8: #{outconv_forward.1} parent=0 // pred_region
    _
  $region9: #{outconv_forward.1} parent=0 // pred_fallthru
    _
  // Predicated region
  $region10: #{outconv_forward.1} parent=0 // pred_check
    _
  $region11: #{outconv_forward.1} parent=0 // pred_check_branch
    %13 = sbr.rel (0) target = $region13
  $region12: #{outconv_forward.1} parent=0 // pred_region
    _
  $region13: #{outconv_forward.1} parent=0 // pred_fallthru
    _
  %v14 = vld [vmem:[%s0] sm:$0xff]
  %v15 = vld [vmem:[%s1] sm:$0xff]
  %v16 = vld [vmem:[%s2] sm:$0xf]
  %18 = vset.pattern.permute.xlu0 0
  %19 = vperm.xlu0 %18, %v15
  %v20 = vpop.permute.xlu0 %19
  %vm22 = vcmask 31744
  %v24 = vsel %vm22, %v14, 0
  %vm26 = vcmask 1043456
  %v28 = vsel %vm26, %v16, 0
  %30 = vmatprep.subr.mxu0 0.0
  %v31 = vand.u32 %v28, 4294901760
  %32 = vmatpush1.msra.mxu0 %v31
  %33 = vmatprep.subr.mxu0 0.0
  %34 = vmatpush1.msra.mxu0 0.0
  %35 = vmatprep.subr.mxu0 0.0
  %36 = vmatpush1.msra.mxu0 0.0
  %37 = vmatprep.subr.mxu0 0.0
  %38 = vmatpush1.msra.mxu0 0.0
  %39 = vmatprep.subr.mxu0 0.0
  %40 = vmatpush1.msra.mxu0 0.0
  %41 = vmatprep.subr.mxu0 0.0
  %42 = vmatpush1.msra.mxu0 0.0
  %43 = vmatprep.subr.mxu0 0.0
  %44 = vmatpush1.msra.mxu0 0.0
  %45 = vmatprep.subr.mxu0 0.0
  %46 = vmatpush1.msra.mxu0 0.0
  %47 = vmatprep.subr.mxu0 0.0
  %48 = vmatpush1.msra.mxu0 0.0
  %49 = vmatprep.subr.mxu0 0.0
  %50 = vmatpush1.msra.mxu0 0.0
  %51 = vmatprep.subr.mxu0 0.0
  %52 = vmatpush1.msra.mxu0 0.0
  %53 = vmatprep.subr.mxu0 0.0
  %54 = vmatpush1.msra.mxu0 0.0
  %55 = vmatprep.subr.mxu0 0.0
  %56 = vmatpush1.msra.mxu0 0.0
  %57 = vmatprep.subr.mxu0 0.0
  %58 = vmatpush1.msra.mxu0 0.0
  %59 = vmatprep.subr.mxu0 0.0
  %60 = vmatpush1.msra.mxu0 0.0
  %61 = vmatprep.subr.mxu0 0.0
  %62 = vmatpush1.msra.mxu0 0.0
  %63 = vmatprep.subr.mxu0 0.0
  %64 = vmatpush1.msra.mxu0 0.0
  %65 = vmatprep.subr.mxu0 0.0
  %66 = vmatpush1.msra.mxu0 0.0
  %67 = vmatprep.subr.mxu0 0.0
  %68 = vmatpush1.msra.mxu0 0.0
  %69 = vmatprep.subr.mxu0 0.0
  %70 = vmatpush1.msra.mxu0 0.0
  %71 = vmatprep.subr.mxu0 0.0
  %72 = vmatpush1.msra.mxu0 0.0
  %73 = vmatprep.subr.mxu0 0.0
  %74 = vmatpush1.msra.mxu0 0.0
  %75 = vmatprep.subr.mxu0 0.0
  %76 = vmatpush1.msra.mxu0 0.0
  %77 = vmatprep.subr.mxu0 0.0
  %78 = vmatpush1.msra.mxu0 0.0
  %79 = vmatprep.subr.mxu0 0.0
  %80 = vmatpush1.msra.mxu0 0.0
  %81 = vmatprep.subr.mxu0 0.0
  %82 = vmatpush1.msra.mxu0 0.0
  %83 = vmatprep.subr.mxu0 0.0
  %84 = vmatpush1.msra.mxu0 0.0
  %85 = vmatprep.subr.mxu0 0.0
  %86 = vmatpush1.msra.mxu0 0.0
  %87 = vmatprep.subr.mxu0 0.0
  %88 = vmatpush1.msra.mxu0 0.0
  %89 = vmatprep.subr.mxu0 0.0
  %90 = vmatpush1.msra.mxu0 0.0
  %91 = vmatprep.subr.mxu0 0.0
  %92 = vmatpush1.msra.mxu0 0.0
  %93 = vmatprep.subr.mxu0 0.0
  %94 = vmatpush1.msra.mxu0 0.0
  %95 = vmatprep.mubr.f32.mxu0 0.0
  %v96 = vand.u32 %v24, 4294901760
  %v97 = vsub.f32 %v24, %v96
  %v98 = vand.u32 %v97, 4294901760
  %v99 = vsub.f32 %v97, %v98
  %v100 = vand.u32 %v99, 4294901760
  %101 = vmatmul.mubr.f32.gmra.mrb[0].mxu0 %v100
  %v102 = vpop.f32.mrb[0].mxu0
  %v103 = vadd.f32 %v20, %v102
  %v104 = vpop.f32.mrb[0].mxu0
  %105 = vdwg.mxu0
  %106 = vmatprep.subr.mxu0 0.0
  %v107 = vand.u32 %v28, 4294901760
  %v108 = vsub.f32 %v28, %v107
  %v109 = vand.u32 %v108, 4294901760
  %v110 = vsub.f32 %v108, %v109
  %v111 = vand.u32 %v110, 4294901760
  %112 = vmatpush1.msra.mxu0 %v111
  %113 = vmatprep.subr.mxu0 0.0
  %114 = vmatpush1.msra.mxu0 0.0
  %115 = vmatprep.subr.mxu0 0.0
  %116 = vmatpush1.msra.mxu0 0.0
  %117 = vmatprep.subr.mxu0 0.0
  %118 = vmatpush1.msra.mxu0 0.0
  %119 = vmatprep.subr.mxu0 0.0
  %120 = vmatpush1.msra.mxu0 0.0
  %121 = vmatprep.subr.mxu0 0.0
  %122 = vmatpush1.msra.mxu0 0.0
  %123 = vmatprep.subr.mxu0 0.0
  %124 = vmatpush1.msra.mxu0 0.0
  %125 = vmatprep.subr.mxu0 0.0
  %126 = vmatpush1.msra.mxu0 0.0
  %127 = vmatprep.subr.mxu0 0.0
  %128 = vmatpush1.msra.mxu0 0.0
  %129 = vmatprep.subr.mxu0 0.0
  %130 = vmatpush1.msra.mxu0 0.0
  %131 = vmatprep.subr.mxu0 0.0
  %132 = vmatpush1.msra.mxu0 0.0
  %133 = vmatprep.subr.mxu0 0.0
  %134 = vmatpush1.msra.mxu0 0.0
  %135 = vmatprep.subr.mxu0 0.0
  %136 = vmatpush1.msra.mxu0 0.0
  %137 = vmatprep.subr.mxu0 0.0
  %138 = vmatpush1.msra.mxu0 0.0
  %139 = vmatprep.subr.mxu0 0.0
  %140 = vmatpush1.msra.mxu0 0.0
  %141 = vmatprep.subr.mxu0 0.0
  %142 = vmatpush1.msra.mxu0 0.0
  %143 = vmatprep.subr.mxu0 0.0
  %144 = vmatpush1.msra.mxu0 0.0
  %145 = vmatprep.subr.mxu0 0.0
  %146 = vmatpush1.msra.mxu0 0.0
  %147 = vmatprep.subr.mxu0 0.0
  %148 = vmatpush1.msra.mxu0 0.0
  %149 = vmatprep.subr.mxu0 0.0
  %150 = vmatpush1.msra.mxu0 0.0
  %151 = vmatprep.subr.mxu0 0.0
  %152 = vmatpush1.msra.mxu0 0.0
  %153 = vmatprep.subr.mxu0 0.0
  %154 = vmatpush1.msra.mxu0 0.0
  %155 = vmatprep.subr.mxu0 0.0
  %156 = vmatpush1.msra.mxu0 0.0
  %157 = vmatprep.subr.mxu0 0.0
  %158 = vmatpush1.msra.mxu0 0.0
  %159 = vmatprep.subr.mxu0 0.0
  %160 = vmatpush1.msra.mxu0 0.0
  %161 = vmatprep.subr.mxu0 0.0
  %162 = vmatpush1.msra.mxu0 0.0
  %163 = vmatprep.subr.mxu0 0.0
  %164 = vmatpush1.msra.mxu0 0.0
  %165 = vmatprep.subr.mxu0 0.0
  %166 = vmatpush1.msra.mxu0 0.0
  %167 = vmatprep.subr.mxu0 0.0
  %168 = vmatpush1.msra.mxu0 0.0
  %169 = vmatprep.subr.mxu0 0.0
  %170 = vmatpush1.msra.mxu0 0.0
  %171 = vmatprep.subr.mxu0 0.0
  %172 = vmatpush1.msra.mxu0 0.0
  %173 = vmatprep.subr.mxu0 0.0
  %174 = vmatpush1.msra.mxu0 0.0
  %175 = vmatprep.mubr.f32.mxu0 0.0
  %v176 = vand.u32 %v24, 4294901760
  %177 = vmatmul.mubr.f32.gmra.mrb[0].mxu0 %v176
  %v178 = vpop.f32.mrb[0].mxu0
  %v179 = vadd.f32 %v103, %v178
  %v180 = vpop.f32.mrb[0].mxu0
  %181 = vdwg.mxu0
  %182 = vmatprep.subr.mxu0 0.0
  %v183 = vand.u32 %v28, 4294901760
  %v184 = vsub.f32 %v28, %v183
  %185 = vmatpush1.msra.mxu0 %v184
  %186 = vmatprep.subr.mxu0 0.0
  %187 = vmatpush1.msra.mxu0 0.0
  %188 = vmatprep.subr.mxu0 0.0
  %189 = vmatpush1.msra.mxu0 0.0
  %190 = vmatprep.subr.mxu0 0.0
  %191 = vmatpush1.msra.mxu0 0.0
  %192 = vmatprep.subr.mxu0 0.0
  %193 = vmatpush1.msra.mxu0 0.0
  %194 = vmatprep.subr.mxu0 0.0
  %195 = vmatpush1.msra.mxu0 0.0
  %196 = vmatprep.subr.mxu0 0.0
  %197 = vmatpush1.msra.mxu0 0.0
  %198 = vmatprep.subr.mxu0 0.0
  %199 = vmatpush1.msra.mxu0 0.0
  %200 = vmatprep.subr.mxu0 0.0
  %201 = vmatpush1.msra.mxu0 0.0
  %202 = vmatprep.subr.mxu0 0.0
  %203 = vmatpush1.msra.mxu0 0.0
  %204 = vmatprep.subr.mxu0 0.0
  %205 = vmatpush1.msra.mxu0 0.0
  %206 = vmatprep.subr.mxu0 0.0
  %207 = vmatpush1.msra.mxu0 0.0
  %208 = vmatprep.subr.mxu0 0.0
  %209 = vmatpush1.msra.mxu0 0.0
  %210 = vmatprep.subr.mxu0 0.0
  %211 = vmatpush1.msra.mxu0 0.0
  %212 = vmatprep.subr.mxu0 0.0
  %213 = vmatpush1.msra.mxu0 0.0
  %214 = vmatprep.subr.mxu0 0.0
  %215 = vmatpush1.msra.mxu0 0.0
  %216 = vmatprep.subr.mxu0 0.0
  %217 = vmatpush1.msra.mxu0 0.0
  %218 = vmatprep.subr.mxu0 0.0
  %219 = vmatpush1.msra.mxu0 0.0
  %220 = vmatprep.subr.mxu0 0.0
  %221 = vmatpush1.msra.mxu0 0.0
  %222 = vmatprep.subr.mxu0 0.0
  %223 = vmatpush1.msra.mxu0 0.0
  %224 = vmatprep.subr.mxu0 0.0
  %225 = vmatpush1.msra.mxu0 0.0
  %226 = vmatprep.subr.mxu0 0.0
  %227 = vmatpush1.msra.mxu0 0.0
  %228 = vmatprep.subr.mxu0 0.0
  %229 = vmatpush1.msra.mxu0 0.0
  %230 = vmatprep.subr.mxu0 0.0
  %231 = vmatpush1.msra.mxu0 0.0
  %232 = vmatprep.subr.mxu0 0.0
  %233 = vmatpush1.msra.mxu0 0.0
  %234 = vmatprep.subr.mxu0 0.0
  %235 = vmatpush1.msra.mxu0 0.0
  %236 = vmatprep.subr.mxu0 0.0
  %237 = vmatpush1.msra.mxu0 0.0
  %238 = vmatprep.subr.mxu0 0.0
  %239 = vmatpush1.msra.mxu0 0.0
  %240 = vmatprep.subr.mxu0 0.0
  %241 = vmatpush1.msra.mxu0 0.0
  %242 = vmatprep.subr.mxu0 0.0
  %243 = vmatpush1.msra.mxu0 0.0
  %244 = vmatprep.subr.mxu0 0.0
  %245 = vmatpush1.msra.mxu0 0.0
  %246 = vmatprep.subr.mxu0 0.0
  %247 = vmatpush1.msra.mxu0 0.0
  %248 = vmatprep.mubr.f32.mxu0 0.0
  %v249 = vand.u32 %v24, 4294901760
  %v250 = vsub.f32 %v24, %v249
  %251 = vmatmul.mubr.f32.gmra.mrb[0].mxu0 %v250
  %v252 = vpop.f32.mrb[0].mxu0
  %v253 = vadd.f32 %v179, %v252
  %v254 = vpop.f32.mrb[0].mxu0
  %255 = vdwg.mxu0
  %256 = vmatprep.subr.mxu0 0.0
  %v257 = vand.u32 %v28, 4294901760
  %258 = vmatpush1.msra.mxu0 %v257
  %259 = vmatprep.subr.mxu0 0.0
  %260 = vmatpush1.msra.mxu0 0.0
  %261 = vmatprep.subr.mxu0 0.0
  %262 = vmatpush1.msra.mxu0 0.0
  %263 = vmatprep.subr.mxu0 0.0
  %264 = vmatpush1.msra.mxu0 0.0
  %265 = vmatprep.subr.mxu0 0.0
  %266 = vmatpush1.msra.mxu0 0.0
  %267 = vmatprep.subr.mxu0 0.0
  %268 = vmatpush1.msra.mxu0 0.0
  %269 = vmatprep.subr.mxu0 0.0
  %270 = vmatpush1.msra.mxu0 0.0
  %271 = vmatprep.subr.mxu0 0.0
  %272 = vmatpush1.msra.mxu0 0.0
  %273 = vmatprep.subr.mxu0 0.0
  %274 = vmatpush1.msra.mxu0 0.0
  %275 = vmatprep.subr.mxu0 0.0
  %276 = vmatpush1.msra.mxu0 0.0
  %277 = vmatprep.subr.mxu0 0.0
  %278 = vmatpush1.msra.mxu0 0.0
  %279 = vmatprep.subr.mxu0 0.0
  %280 = vmatpush1.msra.mxu0 0.0
  %281 = vmatprep.subr.mxu0 0.0
  %282 = vmatpush1.msra.mxu0 0.0
  %283 = vmatprep.subr.mxu0 0.0
  %284 = vmatpush1.msra.mxu0 0.0
  %285 = vmatprep.subr.mxu0 0.0
  %286 = vmatpush1.msra.mxu0 0.0
  %287 = vmatprep.subr.mxu0 0.0
  %288 = vmatpush1.msra.mxu0 0.0
  %289 = vmatprep.subr.mxu0 0.0
  %290 = vmatpush1.msra.mxu0 0.0
  %291 = vmatprep.subr.mxu0 0.0
  %292 = vmatpush1.msra.mxu0 0.0
  %293 = vmatprep.subr.mxu0 0.0
  %294 = vmatpush1.msra.mxu0 0.0
  %295 = vmatprep.subr.mxu0 0.0
  %296 = vmatpush1.msra.mxu0 0.0
  %297 = vmatprep.subr.mxu0 0.0
  %298 = vmatpush1.msra.mxu0 0.0
  %299 = vmatprep.subr.mxu0 0.0
  %300 = vmatpush1.msra.mxu0 0.0
  %301 = vmatprep.subr.mxu0 0.0
  %302 = vmatpush1.msra.mxu0 0.0
  %303 = vmatprep.subr.mxu0 0.0
  %304 = vmatpush1.msra.mxu0 0.0
  %305 = vmatprep.subr.mxu0 0.0
  %306 = vmatpush1.msra.mxu0 0.0
  %307 = vmatprep.subr.mxu0 0.0
  %308 = vmatpush1.msra.mxu0 0.0
  %309 = vmatprep.subr.mxu0 0.0
  %310 = vmatpush1.msra.mxu0 0.0
  %311 = vmatprep.subr.mxu0 0.0
  %312 = vmatpush1.msra.mxu0 0.0
  %313 = vmatprep.subr.mxu0 0.0
  %314 = vmatpush1.msra.mxu0 0.0
  %315 = vmatprep.subr.mxu0 0.0
  %316 = vmatpush1.msra.mxu0 0.0
  %317 = vmatprep.subr.mxu0 0.0
  %318 = vmatpush1.msra.mxu0 0.0
  %319 = vmatprep.subr.mxu0 0.0
  %320 = vmatpush1.msra.mxu0 0.0
  %321 = vmatprep.mubr.f32.mxu0 0.0
  %v322 = vand.u32 %v24, 4294901760
  %v323 = vsub.f32 %v24, %v322
  %v324 = vand.u32 %v323, 4294901760
  %325 = vmatmul.mubr.f32.gmra.mrb[0].mxu0 %v324
  %v326 = vpop.f32.mrb[0].mxu0
  %v327 = vadd.f32 %v253, %v326
  %v328 = vpop.f32.mrb[0].mxu0
  %329 = vdwg.mxu0
  %330 = vmatprep.subr.mxu0 0.0
  %v331 = vand.u32 %v28, 4294901760
  %v332 = vsub.f32 %v28, %v331
  %v333 = vand.u32 %v332, 4294901760
  %334 = vmatpush1.msra.mxu0 %v333
  %335 = vmatprep.subr.mxu0 0.0
  %336 = vmatpush1.msra.mxu0 0.0
  %337 = vmatprep.subr.mxu0 0.0
  %338 = vmatpush1.msra.mxu0 0.0
  %339 = vmatprep.subr.mxu0 0.0
  %340 = vmatpush1.msra.mxu0 0.0
  %341 = vmatprep.subr.mxu0 0.0
  %342 = vmatpush1.msra.mxu0 0.0
  %343 = vmatprep.subr.mxu0 0.0
  %344 = vmatpush1.msra.mxu0 0.0
  %345 = vmatprep.subr.mxu0 0.0
  %346 = vmatpush1.msra.mxu0 0.0
  %347 = vmatprep.subr.mxu0 0.0
  %348 = vmatpush1.msra.mxu0 0.0
  %349 = vmatprep.subr.mxu0 0.0
  %350 = vmatpush1.msra.mxu0 0.0
  %351 = vmatprep.subr.mxu0 0.0
  %352 = vmatpush1.msra.mxu0 0.0
  %353 = vmatprep.subr.mxu0 0.0
  %354 = vmatpush1.msra.mxu0 0.0
  %355 = vmatprep.subr.mxu0 0.0
  %356 = vmatpush1.msra.mxu0 0.0
  %357 = vmatprep.subr.mxu0 0.0
  %358 = vmatpush1.msra.mxu0 0.0
  %359 = vmatprep.subr.mxu0 0.0
  %360 = vmatpush1.msra.mxu0 0.0
  %361 = vmatprep.subr.mxu0 0.0
  %362 = vmatpush1.msra.mxu0 0.0
  %363 = vmatprep.subr.mxu0 0.0
  %364 = vmatpush1.msra.mxu0 0.0
  %365 = vmatprep.subr.mxu0 0.0
  %366 = vmatpush1.msra.mxu0 0.0
  %367 = vmatprep.subr.mxu0 0.0
  %368 = vmatpush1.msra.mxu0 0.0
  %369 = vmatprep.subr.mxu0 0.0
  %370 = vmatpush1.msra.mxu0 0.0
  %371 = vmatprep.subr.mxu0 0.0
  %372 = vmatpush1.msra.mxu0 0.0
  %373 = vmatprep.subr.mxu0 0.0
  %374 = vmatpush1.msra.mxu0 0.0
  %375 = vmatprep.subr.mxu0 0.0
  %376 = vmatpush1.msra.mxu0 0.0
  %377 = vmatprep.subr.mxu0 0.0
  %378 = vmatpush1.msra.mxu0 0.0
  %379 = vmatprep.subr.mxu0 0.0
  %380 = vmatpush1.msra.mxu0 0.0
  %381 = vmatprep.subr.mxu0 0.0
  %382 = vmatpush1.msra.mxu0 0.0
  %383 = vmatprep.subr.mxu0 0.0
  %384 = vmatpush1.msra.mxu0 0.0
  %385 = vmatprep.subr.mxu0 0.0
  %386 = vmatpush1.msra.mxu0 0.0
  %387 = vmatprep.subr.mxu0 0.0
  %388 = vmatpush1.msra.mxu0 0.0
  %389 = vmatprep.subr.mxu0 0.0
  %390 = vmatpush1.msra.mxu0 0.0
  %391 = vmatprep.subr.mxu0 0.0
  %392 = vmatpush1.msra.mxu0 0.0
  %393 = vmatprep.subr.mxu0 0.0
  %394 = vmatpush1.msra.mxu0 0.0
  %395 = vmatprep.subr.mxu0 0.0
  %396 = vmatpush1.msra.mxu0 0.0
  %397 = vmatprep.mubr.f32.mxu0 0.0
  %v398 = vand.u32 %v24, 4294901760
  %399 = vmatmul.mubr.f32.gmra.mrb[0].mxu0 %v398
  %v400 = vpop.f32.mrb[0].mxu0
  %v401 = vadd.f32 %v327, %v400
  %v402 = vpop.f32.mrb[0].mxu0
  %403 = vdwg.mxu0
  %404 = vmatprep.subr.mxu0 0.0
  %v405 = vand.u32 %v28, 4294901760
  %406 = vmatpush1.msra.mxu0 %v405
  %407 = vmatprep.subr.mxu0 0.0
  %408 = vmatpush1.msra.mxu0 0.0
  %409 = vmatprep.subr.mxu0 0.0
  %410 = vmatpush1.msra.mxu0 0.0
  %411 = vmatprep.subr.mxu0 0.0
  %412 = vmatpush1.msra.mxu0 0.0
  %413 = vmatprep.subr.mxu0 0.0
  %414 = vmatpush1.msra.mxu0 0.0
  %415 = vmatprep.subr.mxu0 0.0
  %416 = vmatpush1.msra.mxu0 0.0
  %417 = vmatprep.subr.mxu0 0.0
  %418 = vmatpush1.msra.mxu0 0.0
  %419 = vmatprep.subr.mxu0 0.0
  %420 = vmatpush1.msra.mxu0 0.0
  %421 = vmatprep.subr.mxu0 0.0
  %422 = vmatpush1.msra.mxu0 0.0
  %423 = vmatprep.subr.mxu0 0.0
  %424 = vmatpush1.msra.mxu0 0.0
  %425 = vmatprep.subr.mxu0 0.0
  %426 = vmatpush1.msra.mxu0 0.0
  %427 = vmatprep.subr.mxu0 0.0
  %428 = vmatpush1.msra.mxu0 0.0
  %429 = vmatprep.subr.mxu0 0.0
  %430 = vmatpush1.msra.mxu0 0.0
  %431 = vmatprep.subr.mxu0 0.0
  %432 = vmatpush1.msra.mxu0 0.0
  %433 = vmatprep.subr.mxu0 0.0
  %434 = vmatpush1.msra.mxu0 0.0
  %435 = vmatprep.subr.mxu0 0.0
  %436 = vmatpush1.msra.mxu0 0.0
  %437 = vmatprep.subr.mxu0 0.0
  %438 = vmatpush1.msra.mxu0 0.0
  %439 = vmatprep.subr.mxu0 0.0
  %440 = vmatpush1.msra.mxu0 0.0
  %441 = vmatprep.subr.mxu0 0.0
  %442 = vmatpush1.msra.mxu0 0.0
  %443 = vmatprep.subr.mxu0 0.0
  %444 = vmatpush1.msra.mxu0 0.0
  %445 = vmatprep.subr.mxu0 0.0
  %446 = vmatpush1.msra.mxu0 0.0
  %447 = vmatprep.subr.mxu0 0.0
  %448 = vmatpush1.msra.mxu0 0.0
  %449 = vmatprep.subr.mxu0 0.0
  %450 = vmatpush1.msra.mxu0 0.0
  %451 = vmatprep.subr.mxu0 0.0
  %452 = vmatpush1.msra.mxu0 0.0
  %453 = vmatprep.subr.mxu0 0.0
  %454 = vmatpush1.msra.mxu0 0.0
  %455 = vmatprep.subr.mxu0 0.0
  %456 = vmatpush1.msra.mxu0 0.0
  %457 = vmatprep.subr.mxu0 0.0
  %458 = vmatpush1.msra.mxu0 0.0
  %459 = vmatprep.subr.mxu0 0.0
  %460 = vmatpush1.msra.mxu0 0.0
  %461 = vmatprep.subr.mxu0 0.0
  %462 = vmatpush1.msra.mxu0 0.0
  %463 = vmatprep.subr.mxu0 0.0
  %464 = vmatpush1.msra.mxu0 0.0
  %465 = vmatprep.subr.mxu0 0.0
  %466 = vmatpush1.msra.mxu0 0.0
  %467 = vmatprep.subr.mxu0 0.0
  %468 = vmatpush1.msra.mxu0 0.0
  %469 = vmatprep.mubr.f32.mxu0 0.0
  %v470 = vand.u32 %v24, 4294901760
  %471 = vmatmul.mubr.f32.gmra.mrb[0].mxu0 %v470
  %v472 = vpop.f32.mrb[0].mxu0
  %v473 = vadd.f32 %v401, %v472
  %v474 = vpop.f32.mrb[0].mxu0
  %475 = vdwg.mxu0
  %vm476 = vcmask 130048
  %477 = vst.msk [vmem:[%s3] sm:$0xff] %vm476, %v473
  %s478 = scalar_lea.vmem %s2, 4
  %v479 = vld [vmem:[%s478] sm:$0xf]
  %v481 = vsel %vm26, %v479, 0
  %483 = vmatprep.subr.mxu0 0.0
  %v484 = vand.u32 %v481, 4294901760
  %485 = vmatpush1.msra.mxu0 %v484
  %486 = vmatprep.subr.mxu0 0.0
  %487 = vmatpush1.msra.mxu0 0.0
  %488 = vmatprep.subr.mxu0 0.0
  %489 = vmatpush1.msra.mxu0 0.0
  %490 = vmatprep.subr.mxu0 0.0
  %491 = vmatpush1.msra.mxu0 0.0
  %492 = vmatprep.subr.mxu0 0.0
  %493 = vmatpush1.msra.mxu0 0.0
  %494 = vmatprep.subr.mxu0 0.0
  %495 = vmatpush1.msra.mxu0 0.0
  %496 = vmatprep.subr.mxu0 0.0
  %497 = vmatpush1.msra.mxu0 0.0
  %498 = vmatprep.subr.mxu0 0.0
  %499 = vmatpush1.msra.mxu0 0.0
  %500 = vmatprep.subr.mxu0 0.0
  %501 = vmatpush1.msra.mxu0 0.0
  %502 = vmatprep.subr.mxu0 0.0
  %503 = vmatpush1.msra.mxu0 0.0
  %504 = vmatprep.subr.mxu0 0.0
  %505 = vmatpush1.msra.mxu0 0.0
  %506 = vmatprep.subr.mxu0 0.0
  %507 = vmatpush1.msra.mxu0 0.0
  %508 = vmatprep.subr.mxu0 0.0
  %509 = vmatpush1.msra.mxu0 0.0
  %510 = vmatprep.subr.mxu0 0.0
  %511 = vmatpush1.msra.mxu0 0.0
  %512 = vmatprep.subr.mxu0 0.0
  %513 = vmatpush1.msra.mxu0 0.0
  %514 = vmatprep.subr.mxu0 0.0
  %515 = vmatpush1.msra.mxu0 0.0
  %516 = vmatprep.subr.mxu0 0.0
  %517 = vmatpush1.msra.mxu0 0.0
  %518 = vmatprep.subr.mxu0 0.0
  %519 = vmatpush1.msra.mxu0 0.0
  %520 = vmatprep.subr.mxu0 0.0
  %521 = vmatpush1.msra.mxu0 0.0
  %522 = vmatprep.subr.mxu0 0.0
  %523 = vmatpush1.msra.mxu0 0.0
  %524 = vmatprep.subr.mxu0 0.0
  %525 = vmatpush1.msra.mxu0 0.0
  %526 = vmatprep.subr.mxu0 0.0
  %527 = vmatpush1.msra.mxu0 0.0
  %528 = vmatprep.subr.mxu0 0.0
  %529 = vmatpush1.msra.mxu0 0.0
  %530 = vmatprep.subr.mxu0 0.0
  %531 = vmatpush1.msra.mxu0 0.0
  %532 = vmatprep.subr.mxu0 0.0
  %533 = vmatpush1.msra.mxu0 0.0
  %534 = vmatprep.subr.mxu0 0.0
  %535 = vmatpush1.msra.mxu0 0.0
  %536 = vmatprep.subr.mxu0 0.0
  %537 = vmatpush1.msra.mxu0 0.0
  %538 = vmatprep.subr.mxu0 0.0
  %539 = vmatpush1.msra.mxu0 0.0
  %540 = vmatprep.subr.mxu0 0.0
  %541 = vmatpush1.msra.mxu0 0.0
  %542 = vmatprep.subr.mxu0 0.0
  %543 = vmatpush1.msra.mxu0 0.0
  %544 = vmatprep.subr.mxu0 0.0
  %545 = vmatpush1.msra.mxu0 0.0
  %546 = vmatprep.subr.mxu0 0.0
  %547 = vmatpush1.msra.mxu0 0.0
  %548 = vmatprep.mubr.f32.mxu0 0.0
  %v549 = vand.u32 %v24, 4294901760
  %v550 = vsub.f32 %v24, %v549
  %v551 = vand.u32 %v550, 4294901760
  %v552 = vsub.f32 %v550, %v551
  %v553 = vand.u32 %v552, 4294901760
  %554 = vmatmul.mubr.f32.gmra.mrb[0].mxu0 %v553
  %v555 = vpop.f32.mrb[0].mxu0
  %v556 = vadd.f32 %v20, %v555
  %v557 = vpop.f32.mrb[0].mxu0
  %558 = vdwg.mxu0
  %559 = vmatprep.subr.mxu0 0.0
  %v560 = vand.u32 %v481, 4294901760
  %v561 = vsub.f32 %v481, %v560
  %v562 = vand.u32 %v561, 4294901760
  %v563 = vsub.f32 %v561, %v562
  %v564 = vand.u32 %v563, 4294901760
  %565 = vmatpush1.msra.mxu0 %v564
  %566 = vmatprep.subr.mxu0 0.0
  %567 = vmatpush1.msra.mxu0 0.0
  %568 = vmatprep.subr.mxu0 0.0
  %569 = vmatpush1.msra.mxu0 0.0
  %570 = vmatprep.subr.mxu0 0.0
  %571 = vmatpush1.msra.mxu0 0.0
  %572 = vmatprep.subr.mxu0 0.0
  %573 = vmatpush1.msra.mxu0 0.0
  %574 = vmatprep.subr.mxu0 0.0
  %575 = vmatpush1.msra.mxu0 0.0
  %576 = vmatprep.subr.mxu0 0.0
  %577 = vmatpush1.msra.mxu0 0.0
  %578 = vmatprep.subr.mxu0 0.0
  %579 = vmatpush1.msra.mxu0 0.0
  %580 = vmatprep.subr.mxu0 0.0
  %581 = vmatpush1.msra.mxu0 0.0
  %582 = vmatprep.subr.mxu0 0.0
  %583 = vmatpush1.msra.mxu0 0.0
  %584 = vmatprep.subr.mxu0 0.0
  %585 = vmatpush1.msra.mxu0 0.0
  %586 = vmatprep.subr.mxu0 0.0
  %587 = vmatpush1.msra.mxu0 0.0
  %588 = vmatprep.subr.mxu0 0.0
  %589 = vmatpush1.msra.mxu0 0.0
  %590 = vmatprep.subr.mxu0 0.0
  %591 = vmatpush1.msra.mxu0 0.0
  %592 = vmatprep.subr.mxu0 0.0
  %593 = vmatpush1.msra.mxu0 0.0
  %594 = vmatprep.subr.mxu0 0.0
  %595 = vmatpush1.msra.mxu0 0.0
  %596 = vmatprep.subr.mxu0 0.0
  %597 = vmatpush1.msra.mxu0 0.0
  %598 = vmatprep.subr.mxu0 0.0
  %599 = vmatpush1.msra.mxu0 0.0
  %600 = vmatprep.subr.mxu0 0.0
  %601 = vmatpush1.msra.mxu0 0.0
  %602 = vmatprep.subr.mxu0 0.0
  %603 = vmatpush1.msra.mxu0 0.0
  %604 = vmatprep.subr.mxu0 0.0
  %605 = vmatpush1.msra.mxu0 0.0
  %606 = vmatprep.subr.mxu0 0.0
  %607 = vmatpush1.msra.mxu0 0.0
  %608 = vmatprep.subr.mxu0 0.0
  %609 = vmatpush1.msra.mxu0 0.0
  %610 = vmatprep.subr.mxu0 0.0
  %611 = vmatpush1.msra.mxu0 0.0
  %612 = vmatprep.subr.mxu0 0.0
  %613 = vmatpush1.msra.mxu0 0.0
  %614 = vmatprep.subr.mxu0 0.0
  %615 = vmatpush1.msra.mxu0 0.0
  %616 = vmatprep.subr.mxu0 0.0
  %617 = vmatpush1.msra.mxu0 0.0
  %618 = vmatprep.subr.mxu0 0.0
  %619 = vmatpush1.msra.mxu0 0.0
  %620 = vmatprep.subr.mxu0 0.0
  %621 = vmatpush1.msra.mxu0 0.0
  %622 = vmatprep.subr.mxu0 0.0
  %623 = vmatpush1.msra.mxu0 0.0
  %624 = vmatprep.subr.mxu0 0.0
  %625 = vmatpush1.msra.mxu0 0.0
  %626 = vmatprep.subr.mxu0 0.0
  %627 = vmatpush1.msra.mxu0 0.0
  %628 = vmatprep.mubr.f32.mxu0 0.0
  %v629 = vand.u32 %v24, 4294901760
  %630 = vmatmul.mubr.f32.gmra.mrb[0].mxu0 %v629
  %v631 = vpop.f32.mrb[0].mxu0
  %v632 = vadd.f32 %v556, %v631
  %v633 = vpop.f32.mrb[0].mxu0
  %634 = vdwg.mxu0
  %635 = vmatprep.subr.mxu0 0.0
  %v636 = vand.u32 %v481, 4294901760
  %v637 = vsub.f32 %v481, %v636
  %638 = vmatpush1.msra.mxu0 %v637
  %639 = vmatprep.subr.mxu0 0.0
  %640 = vmatpush1.msra.mxu0 0.0
  %641 = vmatprep.subr.mxu0 0.0
  %642 = vmatpush1.msra.mxu0 0.0
  %643 = vmatprep.subr.mxu0 0.0
  %644 = vmatpush1.msra.mxu0 0.0
  %645 = vmatprep.subr.mxu0 0.0
  %646 = vmatpush1.msra.mxu0 0.0
  %647 = vmatprep.subr.mxu0 0.0
  %648 = vmatpush1.msra.mxu0 0.0
  %649 = vmatprep.subr.mxu0 0.0
  %650 = vmatpush1.msra.mxu0 0.0
  %651 = vmatprep.subr.mxu0 0.0
  %652 = vmatpush1.msra.mxu0 0.0
  %653 = vmatprep.subr.mxu0 0.0
  %654 = vmatpush1.msra.mxu0 0.0
  %655 = vmatprep.subr.mxu0 0.0
  %656 = vmatpush1.msra.mxu0 0.0
  %657 = vmatprep.subr.mxu0 0.0
  %658 = vmatpush1.msra.mxu0 0.0
  %659 = vmatprep.subr.mxu0 0.0
  %660 = vmatpush1.msra.mxu0 0.0
  %661 = vmatprep.subr.mxu0 0.0
  %662 = vmatpush1.msra.mxu0 0.0
  %663 = vmatprep.subr.mxu0 0.0
  %664 = vmatpush1.msra.mxu0 0.0
  %665 = vmatprep.subr.mxu0 0.0
  %666 = vmatpush1.msra.mxu0 0.0
  %667 = vmatprep.subr.mxu0 0.0
  %668 = vmatpush1.msra.mxu0 0.0
  %669 = vmatprep.subr.mxu0 0.0
  %670 = vmatpush1.msra.mxu0 0.0
  %671 = vmatprep.subr.mxu0 0.0
  %672 = vmatpush1.msra.mxu0 0.0
  %673 = vmatprep.subr.mxu0 0.0
  %674 = vmatpush1.msra.mxu0 0.0
  %675 = vmatprep.subr.mxu0 0.0
  %676 = vmatpush1.msra.mxu0 0.0
  %677 = vmatprep.subr.mxu0 0.0
  %678 = vmatpush1.msra.mxu0 0.0
  %679 = vmatprep.subr.mxu0 0.0
  %680 = vmatpush1.msra.mxu0 0.0
  %681 = vmatprep.subr.mxu0 0.0
  %682 = vmatpush1.msra.mxu0 0.0
  %683 = vmatprep.subr.mxu0 0.0
  %684 = vmatpush1.msra.mxu0 0.0
  %685 = vmatprep.subr.mxu0 0.0
  %686 = vmatpush1.msra.mxu0 0.0
  %687 = vmatprep.subr.mxu0 0.0
  %688 = vmatpush1.msra.mxu0 0.0
  %689 = vmatprep.subr.mxu0 0.0
  %690 = vmatpush1.msra.mxu0 0.0
  %691 = vmatprep.subr.mxu0 0.0
  %692 = vmatpush1.msra.mxu0 0.0
  %693 = vmatprep.subr.mxu0 0.0
  %694 = vmatpush1.msra.mxu0 0.0
  %695 = vmatprep.subr.mxu0 0.0
  %696 = vmatpush1.msra.mxu0 0.0
  %697 = vmatprep.subr.mxu0 0.0
  %698 = vmatpush1.msra.mxu0 0.0
  %699 = vmatprep.subr.mxu0 0.0
  %700 = vmatpush1.msra.mxu0 0.0
  %701 = vmatprep.mubr.f32.mxu0 0.0
  %v702 = vand.u32 %v24, 4294901760
  %v703 = vsub.f32 %v24, %v702
  %704 = vmatmul.mubr.f32.gmra.mrb[0].mxu0 %v703
  %v705 = vpop.f32.mrb[0].mxu0
  %v706 = vadd.f32 %v632, %v705
  %v707 = vpop.f32.mrb[0].mxu0
  %708 = vdwg.mxu0
  %709 = vmatprep.subr.mxu0 0.0
  %v710 = vand.u32 %v481, 4294901760
  %711 = vmatpush1.msra.mxu0 %v710
  %712 = vmatprep.subr.mxu0 0.0
  %713 = vmatpush1.msra.mxu0 0.0
  %714 = vmatprep.subr.mxu0 0.0
  %715 = vmatpush1.msra.mxu0 0.0
  %716 = vmatprep.subr.mxu0 0.0
  %717 = vmatpush1.msra.mxu0 0.0
  %718 = vmatprep.subr.mxu0 0.0
  %719 = vmatpush1.msra.mxu0 0.0
  %720 = vmatprep.subr.mxu0 0.0
  %721 = vmatpush1.msra.mxu0 0.0
  %722 = vmatprep.subr.mxu0 0.0
  %723 = vmatpush1.msra.mxu0 0.0
  %724 = vmatprep.subr.mxu0 0.0
  %725 = vmatpush1.msra.mxu0 0.0
  %726 = vmatprep.subr.mxu0 0.0
  %727 = vmatpush1.msra.mxu0 0.0
  %728 = vmatprep.subr.mxu0 0.0
  %729 = vmatpush1.msra.mxu0 0.0
  %730 = vmatprep.subr.mxu0 0.0
  %731 = vmatpush1.msra.mxu0 0.0
  %732 = vmatprep.subr.mxu0 0.0
  %733 = vmatpush1.msra.mxu0 0.0
  %734 = vmatprep.subr.mxu0 0.0
  %735 = vmatpush1.msra.mxu0 0.0
  %736 = vmatprep.subr.mxu0 0.0
  %737 = vmatpush1.msra.mxu0 0.0
  %738 = vmatprep.subr.mxu0 0.0
  %739 = vmatpush1.msra.mxu0 0.0
  %740 = vmatprep.subr.mxu0 0.0
  %741 = vmatpush1.msra.mxu0 0.0
  %742 = vmatprep.subr.mxu0 0.0
  %743 = vmatpush1.msra.mxu0 0.0
  %744 = vmatprep.subr.mxu0 0.0
  %745 = vmatpush1.msra.mxu0 0.0
  %746 = vmatprep.subr.mxu0 0.0
  %747 = vmatpush1.msra.mxu0 0.0
  %748 = vmatprep.subr.mxu0 0.0
  %749 = vmatpush1.msra.mxu0 0.0
  %750 = vmatprep.subr.mxu0 0.0
  %751 = vmatpush1.msra.mxu0 0.0
  %752 = vmatprep.subr.mxu0 0.0
  %753 = vmatpush1.msra.mxu0 0.0
  %754 = vmatprep.subr.mxu0 0.0
  %755 = vmatpush1.msra.mxu0 0.0
  %756 = vmatprep.subr.mxu0 0.0
  %757 = vmatpush1.msra.mxu0 0.0
  %758 = vmatprep.subr.mxu0 0.0
  %759 = vmatpush1.msra.mxu0 0.0
  %760 = vmatprep.subr.mxu0 0.0
  %761 = vmatpush1.msra.mxu0 0.0
  %762 = vmatprep.subr.mxu0 0.0
  %763 = vmatpush1.msra.mxu0 0.0
  %764 = vmatprep.subr.mxu0 0.0
  %765 = vmatpush1.msra.mxu0 0.0
  %766 = vmatprep.subr.mxu0 0.0
  %767 = vmatpush1.msra.mxu0 0.0
  %768 = vmatprep.subr.mxu0 0.0
  %769 = vmatpush1.msra.mxu0 0.0
  %770 = vmatprep.subr.mxu0 0.0
  %771 = vmatpush1.msra.mxu0 0.0
  %772 = vmatprep.subr.mxu0 0.0
  %773 = vmatpush1.msra.mxu0 0.0
  %774 = vmatprep.mubr.f32.mxu0 0.0
  %v775 = vand.u32 %v24, 4294901760
  %v776 = vsub.f32 %v24, %v775
  %v777 = vand.u32 %v776, 4294901760
  %778 = vmatmul.mubr.f32.gmra.mrb[0].mxu0 %v777
  %v779 = vpop.f32.mrb[0].mxu0
  %v780 = vadd.f32 %v706, %v779
  %v781 = vpop.f32.mrb[0].mxu0
  %782 = vdwg.mxu0
  %783 = vmatprep.subr.mxu0 0.0
  %v784 = vand.u32 %v481, 4294901760
  %v785 = vsub.f32 %v481, %v784
  %v786 = vand.u32 %v785, 4294901760
  %787 = vmatpush1.msra.mxu0 %v786
  %788 = vmatprep.subr.mxu0 0.0
  %789 = vmatpush1.msra.mxu0 0.0
  %790 = vmatprep.subr.mxu0 0.0
  %791 = vmatpush1.msra.mxu0 0.0
  %792 = vmatprep.subr.mxu0 0.0
  %793 = vmatpush1.msra.mxu0 0.0
  %794 = vmatprep.subr.mxu0 0.0
  %795 = vmatpush1.msra.mxu0 0.0
  %796 = vmatprep.subr.mxu0 0.0
  %797 = vmatpush1.msra.mxu0 0.0
  %798 = vmatprep.subr.mxu0 0.0
  %799 = vmatpush1.msra.mxu0 0.0
  %800 = vmatprep.subr.mxu0 0.0
  %801 = vmatpush1.msra.mxu0 0.0
  %802 = vmatprep.subr.mxu0 0.0
  %803 = vmatpush1.msra.mxu0 0.0
  %804 = vmatprep.subr.mxu0 0.0
  %805 = vmatpush1.msra.mxu0 0.0
  %806 = vmatprep.subr.mxu0 0.0
  %807 = vmatpush1.msra.mxu0 0.0
  %808 = vmatprep.subr.mxu0 0.0
  %809 = vmatpush1.msra.mxu0 0.0
  %810 = vmatprep.subr.mxu0 0.0
  %811 = vmatpush1.msra.mxu0 0.0
  %812 = vmatprep.subr.mxu0 0.0
  %813 = vmatpush1.msra.mxu0 0.0
  %814 = vmatprep.subr.mxu0 0.0
  %815 = vmatpush1.msra.mxu0 0.0
  %816 = vmatprep.subr.mxu0 0.0
  %817 = vmatpush1.msra.mxu0 0.0
  %818 = vmatprep.subr.mxu0 0.0
  %819 = vmatpush1.msra.mxu0 0.0
  %820 = vmatprep.subr.mxu0 0.0
  %821 = vmatpush1.msra.mxu0 0.0
  %822 = vmatprep.subr.mxu0 0.0
  %823 = vmatpush1.msra.mxu0 0.0
  %824 = vmatprep.subr.mxu0 0.0
  %825 = vmatpush1.msra.mxu0 0.0
  %826 = vmatprep.subr.mxu0 0.0
  %827 = vmatpush1.msra.mxu0 0.0
  %828 = vmatprep.subr.mxu0 0.0
  %829 = vmatpush1.msra.mxu0 0.0
  %830 = vmatprep.subr.mxu0 0.0
  %831 = vmatpush1.msra.mxu0 0.0
  %832 = vmatprep.subr.mxu0 0.0
  %833 = vmatpush1.msra.mxu0 0.0
  %834 = vmatprep.subr.mxu0 0.0
  %835 = vmatpush1.msra.mxu0 0.0
  %836 = vmatprep.subr.mxu0 0.0
  %837 = vmatpush1.msra.mxu0 0.0
  %838 = vmatprep.subr.mxu0 0.0
  %839 = vmatpush1.msra.mxu0 0.0
  %840 = vmatprep.subr.mxu0 0.0
  %841 = vmatpush1.msra.mxu0 0.0
  %842 = vmatprep.subr.mxu0 0.0
  %843 = vmatpush1.msra.mxu0 0.0
  %844 = vmatprep.subr.mxu0 0.0
  %845 = vmatpush1.msra.mxu0 0.0
  %846 = vmatprep.subr.mxu0 0.0
  %847 = vmatpush1.msra.mxu0 0.0
  %848 = vmatprep.subr.mxu0 0.0
  %849 = vmatpush1.msra.mxu0 0.0
  %850 = vmatprep.mubr.f32.mxu0 0.0
  %v851 = vand.u32 %v24, 4294901760
  %852 = vmatmul.mubr.f32.gmra.mrb[0].mxu0 %v851
  %v853 = vpop.f32.mrb[0].mxu0
  %v854 = vadd.f32 %v780, %v853
  %v855 = vpop.f32.mrb[0].mxu0
  %856 = vdwg.mxu0
  %857 = vmatprep.subr.mxu0 0.0
  %v858 = vand.u32 %v481, 4294901760
  %859 = vmatpush1.msra.mxu0 %v858
  %860 = vmatprep.subr.mxu0 0.0
  %861 = vmatpush1.msra.mxu0 0.0
  %862 = vmatprep.subr.mxu0 0.0
  %863 = vmatpush1.msra.mxu0 0.0
  %864 = vmatprep.subr.mxu0 0.0
  %865 = vmatpush1.msra.mxu0 0.0
  %866 = vmatprep.subr.mxu0 0.0
  %867 = vmatpush1.msra.mxu0 0.0
  %868 = vmatprep.subr.mxu0 0.0
  %869 = vmatpush1.msra.mxu0 0.0
  %870 = vmatprep.subr.mxu0 0.0
  %871 = vmatpush1.msra.mxu0 0.0
  %872 = vmatprep.subr.mxu0 0.0
  %873 = vmatpush1.msra.mxu0 0.0
  %874 = vmatprep.subr.mxu0 0.0
  %875 = vmatpush1.msra.mxu0 0.0
  %876 = vmatprep.subr.mxu0 0.0
  %877 = vmatpush1.msra.mxu0 0.0
  %878 = vmatprep.subr.mxu0 0.0
  %879 = vmatpush1.msra.mxu0 0.0
  %880 = vmatprep.subr.mxu0 0.0
  %881 = vmatpush1.msra.mxu0 0.0
  %882 = vmatprep.subr.mxu0 0.0
  %883 = vmatpush1.msra.mxu0 0.0
  %884 = vmatprep.subr.mxu0 0.0
  %885 = vmatpush1.msra.mxu0 0.0
  %886 = vmatprep.subr.mxu0 0.0
  %887 = vmatpush1.msra.mxu0 0.0
  %888 = vmatprep.subr.mxu0 0.0
  %889 = vmatpush1.msra.mxu0 0.0
  %890 = vmatprep.subr.mxu0 0.0
  %891 = vmatpush1.msra.mxu0 0.0
  %892 = vmatprep.subr.mxu0 0.0
  %893 = vmatpush1.msra.mxu0 0.0
  %894 = vmatprep.subr.mxu0 0.0
  %895 = vmatpush1.msra.mxu0 0.0
  %896 = vmatprep.subr.mxu0 0.0
  %897 = vmatpush1.msra.mxu0 0.0
  %898 = vmatprep.subr.mxu0 0.0
  %899 = vmatpush1.msra.mxu0 0.0
  %900 = vmatprep.subr.mxu0 0.0
  %901 = vmatpush1.msra.mxu0 0.0
  %902 = vmatprep.subr.mxu0 0.0
  %903 = vmatpush1.msra.mxu0 0.0
  %904 = vmatprep.subr.mxu0 0.0
  %905 = vmatpush1.msra.mxu0 0.0
  %906 = vmatprep.subr.mxu0 0.0
  %907 = vmatpush1.msra.mxu0 0.0
  %908 = vmatprep.subr.mxu0 0.0
  %909 = vmatpush1.msra.mxu0 0.0
  %910 = vmatprep.subr.mxu0 0.0
  %911 = vmatpush1.msra.mxu0 0.0
  %912 = vmatprep.subr.mxu0 0.0
  %913 = vmatpush1.msra.mxu0 0.0
  %914 = vmatprep.subr.mxu0 0.0
  %915 = vmatpush1.msra.mxu0 0.0
  %916 = vmatprep.subr.mxu0 0.0
  %917 = vmatpush1.msra.mxu0 0.0
  %918 = vmatprep.subr.mxu0 0.0
  %919 = vmatpush1.msra.mxu0 0.0
  %920 = vmatprep.subr.mxu0 0.0
  %921 = vmatpush1.msra.mxu0 0.0
  %922 = vmatprep.mubr.f32.mxu0 0.0
  %v923 = vand.u32 %v24, 4294901760
  %924 = vmatmul.mubr.f32.gmra.mrb[0].mxu0 %v923
  %v925 = vpop.f32.mrb[0].mxu0
  %v926 = vadd.f32 %v854, %v925
  %v927 = vpop.f32.mrb[0].mxu0
  %928 = vdwg.mxu0
  %s929 = scalar_lea.vmem %s3, 8
  %930 = vst.msk [vmem:[%s929] sm:$0xff] %vm476, %v926
  // Predicated region
  $region14: #{outconv_forward.1} parent=0 // pred_check
    _
  $region15: #{outconv_forward.1} parent=0 // pred_check_branch
    %932 = sbr.rel (0) target = $region17
  $region16: #{outconv_forward.1} parent=0 // pred_region
    _
  $region17: #{outconv_forward.1} parent=0 // pred_fallthru
    _
  // Predicated region
  $region18: #{outconv_forward.1} parent=0 // pred_check
    _
  $region19: #{outconv_forward.1} parent=0 // pred_check_branch
    %934 = sbr.rel (0) target = $region21
  $region20: #{outconv_forward.1} parent=0 // pred_region
    _
  $region21: #{outconv_forward.1} parent=0 // pred_fallthru
    _

</llo_original>
